<compile_context>
chip_gen: v7x
topology: tpu7x:2x2x1
jax: 0.10.0
libtpu: 0.0.40
codegen_flags: <defaults>
</compile_context>

<pallas_src>
import functools

import jax
import jax.numpy as jnp
from jax import lax
from jax.experimental import pallas as pl
from jax.experimental.pallas import tpu as pltpu

_LANE = 128               # boxes per lane group (TPU lane width)
_MAX_BLOCK_GROUPS = 512   # 512 * 128 = 65536 boxes per grid step (2x1 MiB in, 256 KiB out)


def _round_up(x, m):
    return ((x + m - 1) // m) * m


def _compute_loss_block(pred_ref, tgt_ref):
    """pred_ref/tgt_ref: (4, S, 128) SoA [cx, cy, w, h]; returns (S, 128) f32 loss."""
    # All math in f32 regardless of input dtype (v5e has no bf16 VPU/EUP path).
    p_cx = pred_ref[0].astype(jnp.float32)
    p_cy = pred_ref[1].astype(jnp.float32)
    p_w = pred_ref[2].astype(jnp.float32)
    p_h = pred_ref[3].astype(jnp.float32)
    t_cx = tgt_ref[0].astype(jnp.float32)
    t_cy = tgt_ref[1].astype(jnp.float32)
    t_w = tgt_ref[2].astype(jnp.float32)
    t_h = tgt_ref[3].astype(jnp.float32)

    # Hoisted half-extents (reused by both tl and br; don't rely on Mosaic CSE).
    p_hw = p_w * 0.5
    p_hh = p_h * 0.5
    t_hw = t_w * 0.5
    t_hh = t_h * 0.5

    tl_x = jnp.maximum(p_cx - p_hw, t_cx - t_hw)
    tl_y = jnp.maximum(p_cy - p_hh, t_cy - t_hh)
    br_x = jnp.minimum(p_cx + p_hw, t_cx + t_hw)
    br_y = jnp.minimum(p_cy + p_hh, t_cy + t_hh)

    area_p = p_w * p_h
    area_g = t_w * t_h

    en = jnp.logical_and(tl_x < br_x, tl_y < br_y).astype(jnp.float32)
    area_i = (br_x - tl_x) * (br_y - tl_y) * en

    # Exact divide (matches the reference; HBM-bound kernel so VALU cost is hidden).
    iou = area_i / (area_p + area_g - area_i + 1e-16)
    return 1.0 - iou * iou


def _iou_loss_kernel(pred_ref, tgt_ref, loss_ref):
    # loss_ref: (S, 128) — lane-dense, unmasked store.
    loss_ref[...] = _compute_loss_block(pred_ref, tgt_ref).astype(loss_ref.dtype)


def _iou_loss_reduce_kernel(pred_ref, tgt_ref, acc_ref, *, n_boxes, block_boxes):
    # acc_ref: (8, 128) f32 per-lane partial sums, resident across the grid.
    i = pl.program_id(0)

    @pl.when(i == 0)
    def _():
        acc_ref[...] = jnp.zeros_like(acc_ref)

    loss = _compute_loss_block(pred_ref, tgt_ref)          # (S, 128) f32
    s = loss.shape[0]
    # Mask padded boxes (they evaluate to loss = 1.0) against the true box count.
    row = lax.broadcasted_iota(jnp.int32, loss.shape, 0)
    col = lax.broadcasted_iota(jnp.int32, loss.shape, 1)
    idx = i * block_boxes + row * _LANE + col
    loss = jnp.where(idx < n_boxes, loss, 0.0)
    acc_ref[...] += jnp.sum(loss.reshape(s // 8, 8, _LANE), axis=0)


@functools.partial(jax.jit, static_argnames=("reduction",))
def iou_loss(pred, target, reduction="none"):
    """Pallas implementation of IOUloss.forward."""
    pred2 = pred.reshape(-1, 4)
    tgt2 = target.reshape(-1, 4)
    n = pred2.shape[0]

    n_groups = -(-n // _LANE)                                    # ceil(n / 128)
    # >= 2 grid steps when there is enough work (v7x megacore sharding of the
    # "parallel" axis); <= _MAX_BLOCK_GROUPS groups per step (double-buffered VMEM
    # footprint ~4.5 MiB at 512 groups, safe under v5e's 16 MiB scoped-VMEM default).
    steps = max(-(-n_groups // _MAX_BLOCK_GROUPS), 2 if n_groups > 8 else 1)
    s_block = _round_up(-(-n_groups // steps), 8)                # sublane multiple of 8
    groups_pad = _round_up(n_groups, s_block)
    n_pad = groups_pad * _LANE

    def to_soa(x):
        # (n, 4) -> (4, groups_pad, 128) component-major slab.  With allow_input_fusion
        # XLA can fuse this transpose/pad into the pallas_call operand.
        # TODO(synk): producer-side SoA boxes would remove this pass entirely.
        x = x.T
        x = jnp.pad(x, ((0, 0), (0, n_pad - n)))
        return x.reshape(4, groups_pad, _LANE)

    pred_soa = to_soa(pred2)
    tgt_soa = to_soa(tgt2)

    grid = (groups_pad // s_block,)
    in_specs = [
        pl.BlockSpec((4, s_block, _LANE), lambda i: (0, i, 0)),
        pl.BlockSpec((4, s_block, _LANE), lambda i: (0, i, 0)),
    ]

    if reduction == "none":
        loss_pad = pl.pallas_call(
            _iou_loss_kernel,
            out_shape=jax.ShapeDtypeStruct((groups_pad, _LANE), pred2.dtype),
            grid_spec=pltpu.PrefetchScalarGridSpec(
                num_scalar_prefetch=0,
                grid=grid,
                in_specs=in_specs,
                out_specs=pl.BlockSpec((s_block, _LANE), lambda i: (i, 0)),
            ),
            compiler_params=pltpu.CompilerParams(
                dimension_semantics=("parallel",),
                allow_input_fusion=[True, True],
            ),
        )(pred_soa, tgt_soa)
        # Padded lanes evaluate to loss=1 and are sliced off before returning.
        return loss_pad.reshape(-1)[:n]

    # 'mean' / 'sum': accumulate per-lane partial sums in-kernel (no (N,) loss
    # writeback to HBM and re-read); grid axis is "arbitrary" (accumulator pattern).
    kernel = functools.partial(
        _iou_loss_reduce_kernel, n_boxes=n, block_boxes=s_block * _LANE)
    partial_sums = pl.pallas_call(
        kernel,
        out_shape=jax.ShapeDtypeStruct((8, _LANE), jnp.float32),
        grid_spec=pltpu.PrefetchScalarGridSpec(
            num_scalar_prefetch=0,
            grid=grid,
            in_specs=in_specs,
            out_specs=pl.BlockSpec((8, _LANE), lambda i: (0, 0)),
        ),
        compiler_params=pltpu.CompilerParams(
            dimension_semantics=("arbitrary",),
            allow_input_fusion=[True, True],
        ),
    )(pred_soa, tgt_soa)
    total = jnp.sum(partial_sums)
    if reduction == "mean":
        total = total / n
    return total.astype(pred2.dtype)


def _iou_loss_ref(pred, target, reduction="none"):
    """Pure-JAX reference mirroring the PyTorch module."""
    pred = pred.reshape(-1, 4)
    target = target.reshape(-1, 4)
    tl = jnp.maximum(pred[:, :2] - pred[:, 2:] / 2,
                     target[:, :2] - target[:, 2:] / 2)
    br = jnp.minimum(pred[:, :2] + pred[:, 2:] / 2,
                     target[:, :2] + target[:, 2:] / 2)
    area_p = jnp.prod(pred[:, 2:], axis=1)
    area_g = jnp.prod(target[:, 2:], axis=1)
    en = jnp.prod((tl < br).astype(tl.dtype), axis=1)
    area_i = jnp.prod(br - tl, axis=1) * en
    iou = area_i / (area_p + area_g - area_i + 1e-16)
    loss = 1 - iou ** 2
    if reduction == "mean":
        loss = loss.mean()
    elif reduction == "sum":
        loss = loss.sum()
    return loss


def _make_boxes(key, b, a):
    k1, k2, k3, k4 = jax.random.split(key, 4)
    pred_xy = jax.random.uniform(k1, (b, a, 2), jnp.float32, 0.0, 10.0)
    pred_wh = jax.random.uniform(k2, (b, a, 2), jnp.float32, 0.5, 4.0)
    tgt_xy = jax.random.uniform(k3, (b, a, 2), jnp.float32, 0.0, 10.0)
    tgt_wh = jax.random.uniform(k4, (b, a, 2), jnp.float32, 0.5, 4.0)
    pred = jnp.concatenate([pred_xy, pred_wh], axis=-1)
    target = jnp.concatenate([tgt_xy, tgt_wh], axis=-1)
    return pred, target


if __name__ == "__main__":
    key = jax.random.PRNGKey(0)
    k_small, k_big = jax.random.split(key)

    # Small, module-consistent shapes: (batch=2, anchors=16, 4) boxes in cxcywh.
    B, A = 2, 16
    pred, target = _make_boxes(k_small, B, A)

    # reduction='none' (module default)
    out = jax.block_until_ready(iou_loss(pred, target, reduction="none"))
    ref = _iou_loss_ref(pred, target, reduction="none")
    assert out.shape == (B * A,)
    assert jnp.allclose(out, ref, atol=1e-5, rtol=1e-5)

    # in-kernel reduction paths
    for red in ("mean", "sum"):
        o = jax.block_until_ready(iou_loss(pred, target, reduction=red))
        r = _iou_loss_ref(pred, target, reduction=red)
        assert jnp.allclose(o, r, atol=1e-5, rtol=1e-5)

    # medium N with ragged padding to exercise the multi-step grid path
    pred_b, target_b = _make_boxes(k_big, 2, 5000)   # 10000 boxes -> 2 grid steps
    out_b = jax.block_until_ready(iou_loss(pred_b, target_b, reduction="none"))
    ref_b = _iou_loss_ref(pred_b, target_b, reduction="none")
    assert out_b.shape == (10000,)
    assert jnp.allclose(out_b, ref_b, atol=1e-5, rtol=1e-5)

    # multi-step in-kernel accumulation (sum) on the medium case
    out_s = jax.block_until_ready(iou_loss(pred_b, target_b, reduction="sum"))
    ref_s = _iou_loss_ref(pred_b, target_b, reduction="sum")
    assert jnp.allclose(out_s, ref_s, atol=1e-3, rtol=1e-4)

    print("KERNEL_OK")
</pallas_src>

<mosaic_0001>
module attributes {stable_mosaic.version = 11 : i64} {
  func.func @_iou_loss_kernel(%arg0: i32, %arg1: memref<4x8x128xf32, #tpu.memory_space<vmem>>, %arg2: memref<4x8x128xf32, #tpu.memory_space<vmem>>, %arg3: memref<8x128xf32, #tpu.memory_space<vmem>>) attributes {dimension_semantics = [#tpu.dimension_semantics<parallel>], iteration_bounds = array<i64: 1>, scalar_prefetch = 0 : i64, scratch_operands = 0 : i64, tpu.core_type = #tpu.core_type<tc>, window_params = [{transform_indices = @transform_0, window_bounds = array<i64: 4, 8, 128>}, {transform_indices = @transform_1, window_bounds = array<i64: 4, 8, 128>}, {transform_indices = @transform_2, window_bounds = array<i64: 8, 128>}]} {
    %c0 = arith.constant 0 : index
    %c0_0 = arith.constant 0 : index
    %c0_1 = arith.constant 0 : index
    %0 = vector.load %arg1[%c0, %c0_0, %c0_1] : memref<4x8x128xf32, #tpu.memory_space<vmem>>, vector<1x8x128xf32>
    %1 = vector.shape_cast %0 : vector<1x8x128xf32> to vector<8x128xf32>
    %c1 = arith.constant 1 : index
    %c0_2 = arith.constant 0 : index
    %c0_3 = arith.constant 0 : index
    %2 = vector.load %arg1[%c1, %c0_2, %c0_3] : memref<4x8x128xf32, #tpu.memory_space<vmem>>, vector<1x8x128xf32>
    %3 = vector.shape_cast %2 : vector<1x8x128xf32> to vector<8x128xf32>
    %c2 = arith.constant 2 : index
    %c0_4 = arith.constant 0 : index
    %c0_5 = arith.constant 0 : index
    %4 = vector.load %arg1[%c2, %c0_4, %c0_5] : memref<4x8x128xf32, #tpu.memory_space<vmem>>, vector<1x8x128xf32>
    %5 = vector.shape_cast %4 : vector<1x8x128xf32> to vector<8x128xf32>
    %c3 = arith.constant 3 : index
    %c0_6 = arith.constant 0 : index
    %c0_7 = arith.constant 0 : index
    %6 = vector.load %arg1[%c3, %c0_6, %c0_7] : memref<4x8x128xf32, #tpu.memory_space<vmem>>, vector<1x8x128xf32>
    %7 = vector.shape_cast %6 : vector<1x8x128xf32> to vector<8x128xf32>
    %c0_8 = arith.constant 0 : index
    %c0_9 = arith.constant 0 : index
    %c0_10 = arith.constant 0 : index
    %8 = vector.load %arg2[%c0_8, %c0_9, %c0_10] : memref<4x8x128xf32, #tpu.memory_space<vmem>>, vector<1x8x128xf32>
    %9 = vector.shape_cast %8 : vector<1x8x128xf32> to vector<8x128xf32>
    %c1_11 = arith.constant 1 : index
    %c0_12 = arith.constant 0 : index
    %c0_13 = arith.constant 0 : index
    %10 = vector.load %arg2[%c1_11, %c0_12, %c0_13] : memref<4x8x128xf32, #tpu.memory_space<vmem>>, vector<1x8x128xf32>
    %11 = vector.shape_cast %10 : vector<1x8x128xf32> to vector<8x128xf32>
    %c2_14 = arith.constant 2 : index
    %c0_15 = arith.constant 0 : index
    %c0_16 = arith.constant 0 : index
    %12 = vector.load %arg2[%c2_14, %c0_15, %c0_16] : memref<4x8x128xf32, #tpu.memory_space<vmem>>, vector<1x8x128xf32>
    %13 = vector.shape_cast %12 : vector<1x8x128xf32> to vector<8x128xf32>
    %c3_17 = arith.constant 3 : index
    %c0_18 = arith.constant 0 : index
    %c0_19 = arith.constant 0 : index
    %14 = vector.load %arg2[%c3_17, %c0_18, %c0_19] : memref<4x8x128xf32, #tpu.memory_space<vmem>>, vector<1x8x128xf32>
    %15 = vector.shape_cast %14 : vector<1x8x128xf32> to vector<8x128xf32>
    %cst = arith.constant 5.000000e-01 : f32
    %16 = vector.broadcast %cst : f32 to vector<8x128xf32>
    %17 = arith.mulf %5, %16 : vector<8x128xf32>
    %cst_20 = arith.constant 5.000000e-01 : f32
    %18 = vector.broadcast %cst_20 : f32 to vector<8x128xf32>
    %19 = arith.mulf %7, %18 : vector<8x128xf32>
    %cst_21 = arith.constant 5.000000e-01 : f32
    %20 = vector.broadcast %cst_21 : f32 to vector<8x128xf32>
    %21 = arith.mulf %13, %20 : vector<8x128xf32>
    %cst_22 = arith.constant 5.000000e-01 : f32
    %22 = vector.broadcast %cst_22 : f32 to vector<8x128xf32>
    %23 = arith.mulf %15, %22 : vector<8x128xf32>
    %24 = arith.subf %1, %17 : vector<8x128xf32>
    %25 = arith.subf %9, %21 : vector<8x128xf32>
    %26 = arith.maximumf %24, %25 : vector<8x128xf32>
    %27 = arith.subf %3, %19 : vector<8x128xf32>
    %28 = arith.subf %11, %23 : vector<8x128xf32>
    %29 = arith.maximumf %27, %28 : vector<8x128xf32>
    %30 = arith.addf %1, %17 : vector<8x128xf32>
    %31 = arith.addf %9, %21 : vector<8x128xf32>
    %32 = arith.minimumf %30, %31 : vector<8x128xf32>
    %33 = arith.addf %3, %19 : vector<8x128xf32>
    %34 = arith.addf %11, %23 : vector<8x128xf32>
    %35 = arith.minimumf %33, %34 : vector<8x128xf32>
    %36 = arith.mulf %5, %7 : vector<8x128xf32>
    %37 = arith.mulf %13, %15 : vector<8x128xf32>
    %38 = arith.cmpf olt, %26, %32 : vector<8x128xf32>
    %39 = arith.cmpf olt, %29, %35 : vector<8x128xf32>
    %40 = arith.andi %38, %39 : vector<8x128xi1>
    %41 = arith.extui %40 : vector<8x128xi1> to vector<8x128xi32>
    %42 = arith.sitofp %41 : vector<8x128xi32> to vector<8x128xf32>
    %43 = arith.subf %32, %26 : vector<8x128xf32>
    %44 = arith.subf %35, %29 : vector<8x128xf32>
    %45 = arith.mulf %43, %44 : vector<8x128xf32>
    %46 = arith.mulf %45, %42 : vector<8x128xf32>
    %47 = arith.addf %36, %37 : vector<8x128xf32>
    %48 = arith.subf %47, %46 : vector<8x128xf32>
    %cst_23 = arith.constant 1.000000e-16 : f32
    %49 = vector.broadcast %cst_23 : f32 to vector<8x128xf32>
    %50 = arith.addf %48, %49 : vector<8x128xf32>
    %51 = arith.divf %46, %50 : vector<8x128xf32>
    %52 = arith.mulf %51, %51 : vector<8x128xf32>
    %cst_24 = arith.constant 1.000000e+00 : f32
    %53 = vector.broadcast %cst_24 : f32 to vector<8x128xf32>
    %54 = arith.subf %53, %52 : vector<8x128xf32>
    %c0_25 = arith.constant 0 : index
    %c0_26 = arith.constant 0 : index
    %55 = vector.load %arg3[%c0_25, %c0_26] : memref<8x128xf32, #tpu.memory_space<vmem>>, vector<8x128xf32>
    tpu.vector_store %arg3[%c0_25, %c0_26], %54 {strides = array<i32>} : memref<8x128xf32, #tpu.memory_space<vmem>>, vector<8x128xf32>,
    return
  }
  func.func @transform_0(%arg0: i32) -> (i32, i32, i32) {
    %c0_i32 = arith.constant 0 : i32
    %c0_i32_0 = arith.constant 0 : i32
    %c0_i32_1 = arith.constant 0 : i32
    return %c0_i32, %arg0, %c0_i32_0 : i32, i32, i32
  }
  func.func @transform_1(%arg0: i32) -> (i32, i32, i32) {
    %c0_i32 = arith.constant 0 : i32
    %c0_i32_0 = arith.constant 0 : i32
    %c0_i32_1 = arith.constant 0 : i32
    return %c0_i32, %arg0, %c0_i32_0 : i32, i32, i32
  }
  func.func @transform_2(%arg0: i32) -> (i32, i32) {
    %c0_i32 = arith.constant 0 : i32
    %c0_i32_0 = arith.constant 0 : i32
    return %arg0, %c0_i32 : i32, i32
  }
}

</mosaic_0001>

<llo_original>
// kernel: iou_loss.2
$region0: #{iou_loss.2}
  #allocation0 [shape = 'u32[]', space=smem, size = 0x4, offset = 0x4, fixed_abs, tag = 'smem constant byte address 0x4 - core index']
  #allocation1 [shape = 'u32[144,128]{1,0:T(1,128)}', space=vmem, size = 0x12000, scoped, tag = 'internal scratch']
  %s0 = inlined_call_operand.vmem [shape: f32[1,4,8,128], index: 0, kind: input, shape index: {}]
  %s1 = inlined_call_operand.vmem [shape: f32[1,4,8,128], index: 1, kind: input, shape index: {}]
  %s2 = inlined_call_operand.vmem [shape: f32[8,128], index: 2, kind: output, shape index: {}]
  %s3 = sld [smem:[#allocation0]]
  $region18: #{iou_loss.2} parent=0
    _
  %s5 = ssub.s32 1, %s3
  %s6 = scalar_select 0, %s5, %s3
  $region1: #{iou_loss.2} parent=0
    #allocation2 [shape = 'u8[16384]{0}', space=vmem, size = 0x4000, dematerialized = true, scoped, tag = 'FusionAdapter Buffer %fusion.2 = f32[4,8,128]{2,1,0:T(8,128)} fusion(%param_1.2), kind=kLoop, calls=%fused_computation.2.clone, metadata={op_name="jit(iou_loss)/reshape" stack_frame_id=13}']
    #allocation3 [shape = 'u8[16384]{0}', space=vmem, size = 0x4000, dematerialized = true, scoped, tag = 'FusionAdapter Buffer %fusion.1 = f32[4,8,128]{2,1,0:T(8,128)} fusion(%param_0.2), kind=kLoop, calls=%fused_computation.1.clone, metadata={op_name="jit(iou_loss)/reshape" stack_frame_id=18}']
    // Predicated region
    $region2: #{iou_loss.2} parent=1 // pred_check
      _
    $region3: #{iou_loss.2} parent=1 // pred_check_branch
      %8 = sbr.rel (0) target = $region5
    $region4: #{iou_loss.2} parent=1 // pred_region
      _
    $region5: #{iou_loss.2} parent=1 // pred_fallthru
      _
    // Predicated region
    $region6: #{iou_loss.2} parent=1 // pred_check
      _
    $region7: #{iou_loss.2} parent=1 // pred_check_branch
      %10 = sbr.rel (0) target = $region9
    $region8: #{iou_loss.2} parent=1 // pred_region
      _
    $region9: #{iou_loss.2} parent=1 // pred_fallthru
      _
    %v11 = vld [vmem:[%s1] sm:$0xff]
    %13 = vst [vmem:[#allocation2] sm:$0xff] %v11
    %s14 = scalar_lea.vmem %s1, 8
    %v15 = vld [vmem:[%s14] sm:$0xff]
    %s16 = scalar_lea.vmem [#allocation2], 8
    %18 = vst [vmem:[%s16] sm:$0xff] %v15
    %s19 = scalar_lea.vmem %s1, 16
    %v20 = vld [vmem:[%s19] sm:$0xff]
    %s21 = scalar_lea.vmem [#allocation2], 16
    %23 = vst [vmem:[%s21] sm:$0xff] %v20
    %s24 = scalar_lea.vmem %s1, 24
    %v25 = vld [vmem:[%s24] sm:$0xff]
    %s26 = scalar_lea.vmem [#allocation2], 24
    %28 = vst [vmem:[%s26] sm:$0xff] %v25
    %v29 = vld [vmem:[%s0] sm:$0xff]
    %31 = vst [vmem:[#allocation3] sm:$0xff] %v29
    %s32 = scalar_lea.vmem %s0, 8
    %v33 = vld [vmem:[%s32] sm:$0xff]
    %s34 = scalar_lea.vmem [#allocation3], 8
    %36 = vst [vmem:[%s34] sm:$0xff] %v33
    %s37 = scalar_lea.vmem %s0, 16
    %v38 = vld [vmem:[%s37] sm:$0xff]
    %s39 = scalar_lea.vmem [#allocation3], 16
    %41 = vst [vmem:[%s39] sm:$0xff] %v38
    %s42 = scalar_lea.vmem %s0, 24
    %v43 = vld [vmem:[%s42] sm:$0xff]
    %s44 = scalar_lea.vmem [#allocation3], 24
    %46 = vst [vmem:[%s44] sm:$0xff] %v43
    %v47 = vld [vmem:[#allocation2] sm:$0xff]
    %s48 = scalar_lea.vmem [#allocation2], 8
    %v49 = vld [vmem:[%s48] sm:$0xff]
    %s50 = scalar_lea.vmem [#allocation2], 16
    %v51 = vld [vmem:[%s50] sm:$0xff]
    %s52 = scalar_lea.vmem [#allocation2], 24
    %v53 = vld [vmem:[%s52] sm:$0xff]
    %v54 = vld [vmem:[#allocation3] sm:$0xff]
    %s55 = scalar_lea.vmem [#allocation3], 8
    %v56 = vld [vmem:[%s55] sm:$0xff]
    %s57 = scalar_lea.vmem [#allocation3], 16
    %v58 = vld [vmem:[%s57] sm:$0xff]
    %s59 = scalar_lea.vmem [#allocation3], 24
    %v60 = vld [vmem:[%s59] sm:$0xff]
    %v61 = vmul.f32 %v51, 0.5
    %v62 = vmul.f32 %v53, 0.5
    %v63 = vmul.f32 %v58, 0.5
    %v64 = vmul.f32 %v60, 0.5
    %v65 = vsub.f32 %v47, %v61
    %v66 = vsub.f32 %v54, %v63
    %v67 = vmax.f32 %v65, %v66
    %v68 = vsub.f32 %v49, %v62
    %v69 = vsub.f32 %v56, %v64
    %v70 = vmax.f32 %v68, %v69
    %v71 = vadd.f32 %v47, %v61
    %v72 = vadd.f32 %v54, %v63
    %v73 = vmin.f32 %v71, %v72
    %v74 = vadd.f32 %v49, %v62
    %v75 = vadd.f32 %v56, %v64
    %v76 = vmin.f32 %v74, %v75
    %v77 = vmul.f32 %v51, %v53
    %v78 = vmul.f32 %v58, %v60
    %vm79 = vcmp.lt.f32.partialorder %v67, %v73
    %vm80 = vcmp.lt.f32.partialorder %v70, %v76
    %vm81 = vmand %vm79, %vm80
    %v82 = vsel %vm81, 1, 0
    %v83 = vcvt.s32.f32 %v82
    %v84 = vsub.f32 %v73, %v67
    %v85 = vsub.f32 %v76, %v70
    %v86 = vmul.f32 %v84, %v85
    %v87 = vmul.f32 %v86, %v83
    %v88 = vadd.f32 %v77, %v78
    %v89 = vsub.f32 %v88, %v87
    %v90 = vadd.f32 %v89, 1e-16
    %v91 = vrcp.pop %v90
    %v92 = vmul.f32 %v87, %v91
    %v93 = vmul.f32 %v92, %v92
    %v94 = vsub.f32 1.0, %v93
    %95 = vst [vmem:[%s2] sm:$0xff] %v94
    // Predicated region
    $region10: #{iou_loss.2} parent=1 // pred_check
      _
    $region11: #{iou_loss.2} parent=1 // pred_check_branch
      %97 = sbr.rel (0) target = $region13
    $region12: #{iou_loss.2} parent=1 // pred_region
      _
    $region13: #{iou_loss.2} parent=1 // pred_fallthru
      _
    // Predicated region
    $region14: #{iou_loss.2} parent=1 // pred_check
      _
    $region15: #{iou_loss.2} parent=1 // pred_check_branch
      %99 = sbr.rel (0) target = $region17
    $region16: #{iou_loss.2} parent=1 // pred_region
      _
    $region17: #{iou_loss.2} parent=1 // pred_fallthru
      _

</llo_original>
